<compile_context>
chip_gen: v6e
topology: v6e:2x2x1
jax: 0.10.0
libtpu: 0.0.40
codegen_flags: <defaults>
</compile_context>

<pallas_src>
import jax
import jax.numpy as jnp
from jax.experimental import pallas as pl
from jax.experimental.pallas import tpu as pltpu

_MIB = 1024 * 1024


# ----------------------------------------------------------------------------
# Kernels
# ----------------------------------------------------------------------------
def _residual_linear_kernel_inplace(x_ref, w_ref, b_ref, xres_ref, o_ref):
    """f32-output path: accumulate straight into the VMEM-resident out tile.

    x_ref:    (tm, tk)  f32   LHS tile (cast to weight dtype in-kernel)
    w_ref:    (tk, tn)  bf16  weight tile
    b_ref:    (1,  tn)  f32   bias row tile
    xres_ref: (tm, tn)  f32   residual tile
    o_ref:    (tm, tn)  f32   output tile (block index constant across k)
    """
    k = pl.program_id(2)

    @pl.when(k == 0)
    def _init():
        # Fold bias + residual into the accumulator initialization.
        o_ref[...] = xres_ref[...] + b_ref[...]

    o_ref[...] += jnp.dot(
        x_ref[...].astype(w_ref.dtype),
        w_ref[...],
        preferred_element_type=jnp.float32,
    )


def _residual_linear_kernel_acc(x_ref, w_ref, b_ref, xres_ref, o_ref, acc_ref):
    """Generic path (e.g. bf16 output): f32 scratch accumulator, one cast at store."""
    k = pl.program_id(2)

    @pl.when(k == 0)
    def _init():
        acc_ref[...] = xres_ref[...].astype(jnp.float32) + b_ref[...].astype(
            jnp.float32
        )

    acc_ref[...] += jnp.dot(
        x_ref[...].astype(w_ref.dtype),
        w_ref[...],
        preferred_element_type=jnp.float32,
    )

    @pl.when(k == pl.num_programs(2) - 1)
    def _finalize():
        o_ref[...] = acc_ref[...].astype(o_ref.dtype)


# ----------------------------------------------------------------------------
# Tile / VMEM sizing helpers
# ----------------------------------------------------------------------------
def _vmem_capacity_bytes():
    """Physical VMEM per TensorCore; conservative (v7x) fallback if query fails."""
    try:
        cap = int(pltpu.get_tpu_info().vmem_capacity_bytes)
        if cap > 0:
            return cap
    except Exception:
        pass
    return 64 * _MIB


def _vmem_budget_bytes(capacity):
    # v7x (64 MiB/TC): cap the working set at ~46 MiB for compiler headroom.
    # v5e/v6e (128 MiB): allow up to ~96-100 MiB.
    if capacity <= 64 * _MIB:
        return int(capacity * 0.72)
    return min(100 * _MIB, int(capacity * 0.78))


def _pick_tile(dim, preferred, align):
    """Largest `align`-multiple tile <= preferred that divides dim, else dim."""
    if dim <= preferred:
        return dim
    t = (preferred // align) * align
    while t >= align:
        if dim % t == 0:
            return t
        t -= align
    # TODO(synk): awkward (non-align-divisible) dims fall back to the full dim;
    # the budget-shrink loop below may then be unable to reduce that axis.
    return dim


def _shrink_tile(dim, cur, align):
    """Largest aligned divisor of dim <= cur // 2, or cur if none exists."""
    if cur <= align:
        return cur
    t = ((cur // 2) // align) * align
    while t >= align:
        if dim % t == 0:
            return t
        t -= align
    return cur


def _working_set_bytes(tm, tn, tk, bpe_lhs, bpe_w, bpe_res, bpe_out, use_acc):
    dbl_in = 2 * (tm * tk * bpe_lhs + tk * tn * bpe_w + tn * 4 + tm * tn * bpe_res)
    out = 2 * tm * tn * bpe_out
    acc = tm * tn * 4 if use_acc else 0
    return dbl_in + out + acc


# ----------------------------------------------------------------------------
# Wrapper
# ----------------------------------------------------------------------------
def prepare_linear_params(w, b, *, use_bf16_matmul=True):
    """One-time parameter prep: hoists the bf16 weight cast out of the call path.

    w: [in, out] (PyTorch nn.Linear stores weight as [out, in]; pass weight.T).
    b: [out] or [1, out].
    """
    w_mat = w.astype(jnp.bfloat16) if use_bf16_matmul else w
    b_row = jnp.asarray(b).reshape(1, -1).astype(jnp.float32)
    return w_mat, b_row


def residual_linear(x, w, b, *, tm=None, tn=None, tk=None):
    """Fused  Linear(x; w, b) + x  on TPU.   x: [R, H], w: [H, H] (in, out), b: [1, H]."""
    R, H_in = x.shape
    assert w.shape[0] == H_in and w.shape[1] == H_in, "Residual requires fn to preserve shape"
    H = H_in
    assert b.shape == (1, H)

    capacity = _vmem_capacity_bytes()
    budget = _vmem_budget_bytes(capacity)
    big_vmem = capacity > 64 * _MIB

    # Per-generation tile defaults (bigger on 128 MiB chips).
    if tm is None:
        tm = 512
    if tn is None:
        tn = 1024 if big_vmem else 512
    if tk is None:
        tk = 2048 if big_vmem else 1024

    # x stays f32 in HBM, so 8-row sublane alignment is correct for the LHS;
    # tn / tk stay 128-lane aligned (or full dim) for unmasked stores / MXU tiles.
    tm = _pick_tile(R, tm, 8)
    tn = _pick_tile(H, tn, 128)
    tk = _pick_tile(H, tk, 128)

    out_dtype = x.dtype
    use_acc = jnp.dtype(out_dtype) != jnp.dtype(jnp.float32)
    bpe_lhs = jnp.dtype(x.dtype).itemsize
    bpe_w = jnp.dtype(w.dtype).itemsize
    bpe_res = bpe_lhs
    bpe_out = jnp.dtype(out_dtype).itemsize

    # Shrink tiles (tk first, then tn, then tm) until we fit the VMEM budget.
    for _ in range(16):
        if _working_set_bytes(tm, tn, tk, bpe_lhs, bpe_w, bpe_res, bpe_out, use_acc) <= budget:
            break
        new_tk = _shrink_tile(H, tk, 128)
        if new_tk < tk:
            tk = new_tk
            continue
        new_tn = _shrink_tile(H, tn, 128)
        if new_tn < tn:
            tn = new_tn
            continue
        new_tm = _shrink_tile(R, tm, 8)
        if new_tm < tm:
            tm = new_tm
            continue
        break

    # Small-VMEM chips (v7x) have 2 TensorCores sharded over the "parallel"
    # axes: avoid a degenerate 1x1xK grid when the problem is big enough.
    if not big_vmem and R // tm == 1 and H // tn == 1:
        if tm >= 16 and tm % 16 == 0 and R % (tm // 2) == 0:
            tm = tm // 2
        elif tn >= 256 and tn % 256 == 0 and H % (tn // 2) == 0:
            tn = tn // 2

    grid = (R // tm, H // tn, H // tk)

    working = _working_set_bytes(tm, tn, tk, bpe_lhs, bpe_w, bpe_res, bpe_out, use_acc)
    vmem_limit = min(budget, max(int(working * 1.5), 32 * _MIB))

    flops = 2 * R * H * H
    bytes_accessed = (
        x.size * bpe_lhs * (H // tn)       # LHS stream, re-read per output-col tile
        + w.size * bpe_w * (R // tm)       # weight stream, re-read per output-row tile
        + b.size * 4 * (R // tm)           # bias (tiny)
        + x.size * bpe_res                 # residual read (once)
        + R * H * bpe_out                  # output write
    )

    kernel = _residual_linear_kernel_acc if use_acc else _residual_linear_kernel_inplace
    scratch = [pltpu.VMEM((tm, tn), jnp.float32)] if use_acc else []

    return pl.pallas_call(
        kernel,
        out_shape=jax.ShapeDtypeStruct((R, H), out_dtype),
        grid_spec=pltpu.PrefetchScalarGridSpec(
            num_scalar_prefetch=0,
            grid=grid,
            in_specs=[
                pl.BlockSpec((tm, tk), lambda i, j, k: (i, k)),   # x (matmul LHS)
                pl.BlockSpec((tk, tn), lambda i, j, k: (k, j)),   # W tile
                pl.BlockSpec((1, tn), lambda i, j, k: (0, j)),    # bias row
                pl.BlockSpec((tm, tn), lambda i, j, k: (i, j)),   # x (residual)
            ],
            out_specs=pl.BlockSpec((tm, tn), lambda i, j, k: (i, j)),
            scratch_shapes=scratch,
        ),
        compiler_params=pltpu.CompilerParams(
            dimension_semantics=("parallel", "parallel", "arbitrary"),
            vmem_limit_bytes=int(vmem_limit),
        ),
        cost_estimate=pl.CostEstimate(
            flops=flops, transcendentals=0, bytes_accessed=int(bytes_accessed)
        ),
    )(x, w, b, x)


if __name__ == "__main__":
    key = jax.random.PRNGKey(0)
    k_x, k_w, k_b = jax.random.split(key, 3)

    rows, hidden = 8, 32  # small demo shapes; tiles clamp to the full dims
    x = jax.random.normal(k_x, (rows, hidden), dtype=jnp.float32)
    # Synthetic "Linear" params; w is stored [in, out] (= PyTorch weight.T).
    w_f32 = jax.random.normal(k_w, (hidden, hidden), dtype=jnp.float32) * 0.02
    b_f32 = jax.random.normal(k_b, (hidden,), dtype=jnp.float32) * 0.01

    # One-time prep: bf16 weight cast hoisted out of the per-call path.
    w_bf16, b_row = prepare_linear_params(w_f32, b_f32, use_bf16_matmul=True)

    out = jax.block_until_ready(residual_linear(x, w_bf16, b_row))

    assert out.shape == x.shape and out.dtype == x.dtype

    # Tight check against a reference using the same bf16-operand matmul
    # (documented precision policy: bf16 MXU operands, f32 accumulation,
    # f32 bias + residual epilogue).
    ref_bf16 = (
        jnp.dot(
            x.astype(jnp.bfloat16), w_bf16, preferred_element_type=jnp.float32
        )
        + b_row
        + x
    )
    assert jnp.allclose(out, ref_bf16, atol=1e-4, rtol=1e-4)

    # Loose sanity check against the full-f32 reference fn(x) + x.
    ref_f32 = x @ w_f32 + b_row + x
    assert jnp.allclose(out, ref_f32, atol=5e-2, rtol=5e-2)

    print("KERNEL_OK")
</pallas_src>

<mosaic_0001>
module attributes {stable_mosaic.version = 11 : i64} {
  func.func @_residual_linear_kernel_inplace(%arg0: i32, %arg1: i32, %arg2: i32, %arg3: memref<8x32xf32, #tpu.memory_space<vmem>>, %arg4: memref<32x32xbf16, #tpu.memory_space<vmem>>, %arg5: memref<1x32xf32, #tpu.memory_space<vmem>>, %arg6: memref<8x32xf32, #tpu.memory_space<vmem>>, %arg7: memref<8x32xf32, #tpu.memory_space<vmem>>) attributes {dimension_semantics = [#tpu.dimension_semantics<parallel>, #tpu.dimension_semantics<parallel>, #tpu.dimension_semantics<arbitrary>], iteration_bounds = array<i64: 1, 1, 1>, scalar_prefetch = 0 : i64, scratch_operands = 0 : i64, tpu.core_type = #tpu.core_type<tc>, window_params = [{transform_indices = @transform_0, window_bounds = array<i64: 8, 32>}, {transform_indices = @transform_1, window_bounds = array<i64: 32, 32>}, {transform_indices = @transform_2, window_bounds = array<i64: 1, 32>}, {transform_indices = @transform_3, window_bounds = array<i64: 8, 32>}, {transform_indices = @transform_4, window_bounds = array<i64: 8, 32>}]} {
    %c0_i32 = arith.constant 0 : i32
    %0 = arith.cmpi eq, %arg2, %c0_i32 : i32
    %1 = arith.extui %0 : i1 to i32
    %c0_i32_0 = arith.constant 0 : i32
    %2 = arith.cmpi ne, %1, %c0_i32_0 : i32
    scf.if %2 {
      %c0_8 = arith.constant 0 : index
      %c0_9 = arith.constant 0 : index
      %10 = vector.load %arg6[%c0_8, %c0_9] : memref<8x32xf32, #tpu.memory_space<vmem>>, vector<8x32xf32>
      %c0_10 = arith.constant 0 : index
      %c0_11 = arith.constant 0 : index
      %11 = vector.load %arg5[%c0_10, %c0_11] : memref<1x32xf32, #tpu.memory_space<vmem>>, vector<1x32xf32>
      %12 = vector.broadcast %11 : vector<1x32xf32> to vector<8x32xf32>
      %13 = arith.addf %10, %12 : vector<8x32xf32>
      %c0_12 = arith.constant 0 : index
      %c0_13 = arith.constant 0 : index
      %14 = vector.load %arg7[%c0_12, %c0_13] : memref<8x32xf32, #tpu.memory_space<vmem>>, vector<8x32xf32>
      tpu.vector_store %arg7[%c0_12, %c0_13], %13 {strides = array<i32>} : memref<8x32xf32, #tpu.memory_space<vmem>>, vector<8x32xf32>,
    } else {
    }
    %c0 = arith.constant 0 : index
    %c0_1 = arith.constant 0 : index
    %3 = vector.load %arg7[%c0, %c0_1] : memref<8x32xf32, #tpu.memory_space<vmem>>, vector<8x32xf32>
    %c0_2 = arith.constant 0 : index
    %c0_3 = arith.constant 0 : index
    %4 = vector.load %arg3[%c0_2, %c0_3] : memref<8x32xf32, #tpu.memory_space<vmem>>, vector<8x32xf32>
    %5 = arith.truncf %4 : vector<8x32xf32> to vector<8x32xbf16>
    %c0_4 = arith.constant 0 : index
    %c0_5 = arith.constant 0 : index
    %6 = vector.load %arg4[%c0_4, %c0_5] : memref<32x32xbf16, #tpu.memory_space<vmem>>, vector<32x32xbf16>
    %cst = arith.constant dense<0.000000e+00> : vector<8x32xf32>
    %7 = tpu.matmul %5, %6, %cst {dimension_numbers = #tpu.dot_dimension_numbers<[1], [0], [0], [1], [0, 0, 1, 1], [], []>} : vector<8x32xbf16>, vector<32x32xbf16>, vector<8x32xf32> -> vector<8x32xf32>
    %8 = arith.addf %3, %7 : vector<8x32xf32>
    %c0_6 = arith.constant 0 : index
    %c0_7 = arith.constant 0 : index
    %9 = vector.load %arg7[%c0_6, %c0_7] : memref<8x32xf32, #tpu.memory_space<vmem>>, vector<8x32xf32>
    tpu.vector_store %arg7[%c0_6, %c0_7], %8 {strides = array<i32>} : memref<8x32xf32, #tpu.memory_space<vmem>>, vector<8x32xf32>,
    return
  }
  func.func @transform_0(%arg0: i32, %arg1: i32, %arg2: i32) -> (i32, i32) {
    %c0_i32 = arith.constant 0 : i32
    return %arg0, %arg2 : i32, i32
  }
  func.func @transform_1(%arg0: i32, %arg1: i32, %arg2: i32) -> (i32, i32) {
    %c0_i32 = arith.constant 0 : i32
    return %arg2, %arg1 : i32, i32
  }
  func.func @transform_2(%arg0: i32, %arg1: i32, %arg2: i32) -> (i32, i32) {
    %c0_i32 = arith.constant 0 : i32
    %c0_i32_0 = arith.constant 0 : i32
    return %c0_i32, %arg1 : i32, i32
  }
  func.func @transform_3(%arg0: i32, %arg1: i32, %arg2: i32) -> (i32, i32) {
    %c0_i32 = arith.constant 0 : i32
    return %arg0, %arg1 : i32, i32
  }
  func.func @transform_4(%arg0: i32, %arg1: i32, %arg2: i32) -> (i32, i32) {
    %c0_i32 = arith.constant 0 : i32
    return %arg0, %arg1 : i32, i32
  }
}

</mosaic_0001>

<llo_original>
// kernel: tpu_custom_call.1
$region0: #{tpu_custom_call.1}
  #allocation0 [shape = 'u32[]', space=smem, size = 0x4, offset = 0x4, fixed_abs, tag = 'smem constant byte address 0x4 - core index']
  #allocation1 [shape = 'u32[144,128]{1,0:T(1,128)}', space=vmem, size = 0x12000, scoped, tag = 'internal scratch']
  %s0 = inlined_call_operand.hbm [shape: f32[8,32], index: 0, kind: input, shape index: {}]
  %s1 = inlined_call_operand.hbm [shape: bf16[32,32], index: 1, kind: input, shape index: {}]
  %s2 = inlined_call_operand.vmem [shape: f32[1,32], index: 2, kind: input, shape index: {}]
  %s3 = inlined_call_operand.hbm [shape: f32[8,32], index: 3, kind: input, shape index: {}]
  %s4 = inlined_call_operand.hbm [shape: f32[8,32], index: 4, kind: output, shape index: {}]
  %s5 = sld [smem:[#allocation0]]
  $region42: #{tpu_custom_call.1} parent=0
    _
  %s7 = ssub.s32 1, %s5
  %s8 = scalar_select 0, %s7, %s5
  $region1: #{tpu_custom_call.1} parent=0
    #allocation2 [shape = 'u8[4096]{0}', space=vmem, size = 0x1000, scoped, tag = 'input window, operand 0, single buffered']
    #allocation3 [shape = 's32[1]{0}', space=sflag, size = 0x4, scoped, tag = 'scoped memory for tpu_custom_call.1']
    #allocation4 [shape = 's32[1]{0}', space=sflag, size = 0x4, scoped, tag = 'scoped memory for tpu_custom_call.1']
    #allocation5 [shape = 'u8[8192]{0}', space=vmem, size = 0x2000, scoped, tag = 'input window, operand 1, single buffered']
    #allocation6 [shape = 's32[1]{0}', space=sflag, size = 0x4, scoped, tag = 'scoped memory for tpu_custom_call.1']
    #allocation7 [shape = 'u8[4096]{0}', space=vmem, size = 0x1000, scoped, tag = 'input window, operand 3, single buffered']
    #allocation8 [shape = 'u8[4096]{0}', space=vmem, size = 0x1000, scoped, tag = 'output window, operand 0, single buffered']
    %9 = vsyncpa [#allocation3], 0
    %10 = vsyncpa [#allocation6], 0
    %11 = vsyncpa [#allocation4], 0
    // Predicated region
    $region2: #{tpu_custom_call.1} parent=1 // pred_check
      _
    $region3: #{tpu_custom_call.1} parent=1 // pred_check_branch
      %13 = sbr.rel (0) target = $region5
    $region4: #{tpu_custom_call.1} parent=1 // pred_region
      %s15 = ssub.s32 128, 128
      %16 = vsyncadd [#allocation3], %s15
      %s18 = sshll.u32 [#allocation2], 4
      %s19 = int_to_ptr.vmem [resolvable:$true] %s18
      %21 = dma.hbm_to_vmem [thread:$0]  %s0, 128, %s19, [#allocation3]
    $region5: #{tpu_custom_call.1} parent=1 // pred_fallthru
      _
    // Predicated region
    $region6: #{tpu_custom_call.1} parent=1 // pred_check
      _
    $region7: #{tpu_custom_call.1} parent=1 // pred_check_branch
      %23 = sbr.rel (0) target = $region9
    $region8: #{tpu_custom_call.1} parent=1 // pred_region
      %s25 = ssub.s32 256, 256
      %26 = vsyncadd [#allocation6], %s25
      %s27 = sshll.u32 [#allocation5], 4
      %s28 = int_to_ptr.vmem [resolvable:$true] %s27
      %33 = dma.hbm_to_vmem [thread:$0]  %s1, 256, %s28, [#allocation6], 64, 64, 4
    $region9: #{tpu_custom_call.1} parent=1 // pred_fallthru
      _
    // Predicated region
    $region10: #{tpu_custom_call.1} parent=1 // pred_check
      _
    $region11: #{tpu_custom_call.1} parent=1 // pred_check_branch
      %35 = sbr.rel (0) target = $region13
    $region12: #{tpu_custom_call.1} parent=1 // pred_region
      _
    $region13: #{tpu_custom_call.1} parent=1 // pred_fallthru
      _
    // Predicated region
    $region14: #{tpu_custom_call.1} parent=1 // pred_check
      _
    $region15: #{tpu_custom_call.1} parent=1 // pred_check_branch
      %37 = sbr.rel (0) target = $region17
    $region16: #{tpu_custom_call.1} parent=1 // pred_region
      %s39 = ssub.s32 128, 128
      %40 = vsyncadd [#allocation6], %s39
      %s42 = sshll.u32 [#allocation7], 4
      %s43 = int_to_ptr.vmem [resolvable:$true] %s42
      %45 = dma.hbm_to_vmem [thread:$0]  %s3, 128, %s43, [#allocation6]
    $region17: #{tpu_custom_call.1} parent=1 // pred_fallthru
      _
    // Predicated region
    $region18: #{tpu_custom_call.1} parent=1 // pred_check
      _
    $region19: #{tpu_custom_call.1} parent=1 // pred_check_branch
      %47 = sbr.rel (0) target = $region21
    $region20: #{tpu_custom_call.1} parent=1 // pred_region
      %48 = dma.done [#allocation3], 128
    $region21: #{tpu_custom_call.1} parent=1 // pred_fallthru
      _
    // Predicated region
    $region22: #{tpu_custom_call.1} parent=1 // pred_check
      _
    $region23: #{tpu_custom_call.1} parent=1 // pred_check_branch
      %50 = sbr.rel (0) target = $region25
    $region24: #{tpu_custom_call.1} parent=1 // pred_region
      %51 = dma.done [#allocation6], 256
    $region25: #{tpu_custom_call.1} parent=1 // pred_fallthru
      _
    // Predicated region
    $region26: #{tpu_custom_call.1} parent=1 // pred_check
      _
    $region27: #{tpu_custom_call.1} parent=1 // pred_check_branch
      %53 = sbr.rel (0) target = $region29
    $region28: #{tpu_custom_call.1} parent=1 // pred_region
      %54 = dma.done [#allocation6], 128
    $region29: #{tpu_custom_call.1} parent=1 // pred_fallthru
      _
    %p56 = scmp.eq.s32.totalorder 0, 0
    // Predicated region
    $region30: #{tpu_custom_call.1} parent=1 // pred_check
      %p57 = pneg %p56
    $region31: #{tpu_custom_call.1} parent=1 // pred_check_branch
      %59 = sbr.rel (%p57) target = $region33
    $region32: #{tpu_custom_call.1} parent=1 // pred_region
      %v60 = vld [vmem:[#allocation7] sm:$0xff]
      %v61 = vld [vmem:[%s2] sm:$0x1]
      %v63 = vlaneseq
      %v64 = vshrl.u32 %v63, 7
      %v65 = vsub.s32 0, %v64
      %v66 = vrot.slane %v61, %v65
      %v68 = vadd.f32 %v60, %v66
      %vm69 = vcmask 261120
      %70 = vst.msk [vmem:[#allocation8] sm:$0xff] %vm69, %v68
    $region33: #{tpu_custom_call.1} parent=1 // pred_fallthru
      _
    %v71 = vld [vmem:[#allocation8] sm:$0xff]
    %v72 = vld [vmem:[#allocation2] sm:$0xff]
    %v73 = vpack.c.bf16 %v72, %v72
    %v74 = vld [vmem:[#allocation5] sm:$0xf]
    %v75 = vld [vmem:[#allocation5 + $0x4] sm:$0xf]
    %v76 = vld [vmem:[#allocation5 + $0x8] sm:$0xf]
    %v77 = vld [vmem:[#allocation5 + $0xc] sm:$0xf]
    %v82 = vunpack.c.l.b16 %v74
    %v83 = vunpack.c.l.b16 %v75
    %v84 = vunpack.c.l.b16 %v76
    %v85 = vunpack.c.l.b16 %v77
    %v86 = vpack.c.b16 %v83, %v82
    %v87 = vpack.c.b16 %v85, %v84
    %vm90 = vcmask 261120
    %v92 = vsel %vm90, %v73, 0
    %94 = vmatprep.subr.bf16.mxu0 0
    %95 = vmatpush1.bf16.msra.mxu0 0
    %96 = vmatprep.subr.bf16.mxu0 0
    %97 = vmatpush1.bf16.msra.mxu0 0
    %98 = vmatprep.subr.bf16.mxu0 0
    %99 = vmatpush1.bf16.msra.mxu0 0
    %100 = vmatprep.subr.bf16.mxu0 0
    %101 = vmatpush1.bf16.msra.mxu0 0
    %102 = vmatprep.subr.bf16.mxu0 0
    %103 = vmatpush1.bf16.msra.mxu0 0
    %104 = vmatprep.subr.bf16.mxu0 0
    %105 = vmatpush1.bf16.msra.mxu0 0
    %106 = vmatprep.subr.bf16.mxu0 0
    %107 = vmatpush1.bf16.msra.mxu0 %v87
    %108 = vmatprep.subr.bf16.mxu0 0
    %109 = vmatpush1.bf16.msra.mxu0 %v86
    %110 = vmatprep.subr.bf16.mxu0 0
    %111 = vmatpush2.bf16.msra.mxu0 0
    %112 = vmatprep.subr.bf16.mxu0 0
    %113 = vmatpush2.bf16.msra.mxu0 0
    %114 = vmatprep.subr.bf16.mxu0 0
    %115 = vmatpush2.bf16.msra.mxu0 0
    %116 = vmatprep.subr.bf16.mxu0 0
    %117 = vmatpush2.bf16.msra.mxu0 0
    %118 = vmatprep.subr.bf16.mxu0 0
    %119 = vmatpush2.bf16.msra.mxu0 0
    %120 = vmatprep.subr.bf16.mxu0 0
    %121 = vmatpush2.bf16.msra.mxu0 0
    %122 = vmatprep.subr.bf16.mxu0 0
    %123 = vmatpush2.bf16.msra.mxu0 0
    %124 = vmatprep.subr.bf16.mxu0 0
    %125 = vmatpush2.bf16.msra.mxu0 0
    %126 = vmatprep.mubr.bf16.mxu0 0
    %127 = vmatmul.mubr.bf16.gmra.mxu0 %v92
    %v128 = vpop.f32.mrf.mxu0
    %v129 = vadd.f32 0.0, %v128
    %v130 = vpop.f32.mrf.mxu0
    %v131 = vpop.f32.mrf.mxu0
    %v132 = vpop.f32.mrf.mxu0
    %133 = vdwg.mxu0
    %v134 = vadd.f32 %v71, %v129
    %135 = vst.msk [vmem:[#allocation8] sm:$0xff] %vm90, %v134
    // Predicated region
    $region34: #{tpu_custom_call.1} parent=1 // pred_check
      _
    $region35: #{tpu_custom_call.1} parent=1 // pred_check_branch
      %137 = sbr.rel (0) target = $region37
    $region36: #{tpu_custom_call.1} parent=1 // pred_region
      %s139 = ssub.s32 128, 128
      %140 = vsyncadd [#allocation4], %s139
      %s142 = sshll.u32 [#allocation8], 4
      %s143 = int_to_ptr.vmem [resolvable:$true] %s142
      %145 = dma.vmem_to_hbm [thread:$0]  %s143, 128, %s4, [#allocation4]
    $region37: #{tpu_custom_call.1} parent=1 // pred_fallthru
      _
    // Predicated region
    $region38: #{tpu_custom_call.1} parent=1 // pred_check
      _
    $region39: #{tpu_custom_call.1} parent=1 // pred_check_branch
      %147 = sbr.rel (0) target = $region41
    $region40: #{tpu_custom_call.1} parent=1 // pred_region
      %148 = dma.done [#allocation4], 128
    $region41: #{tpu_custom_call.1} parent=1 // pred_fallthru
      _
    %149 = vsyncpa [#allocation3], 1
    %150 = vsyncpa [#allocation6], 1
    %151 = vsyncpa [#allocation4], 1

</llo_original>
